<compile_context>
chip_gen: v6e
topology: v6e:2x2x1
jax: 0.10.0
libtpu: 0.0.40
codegen_flags: <defaults>
</compile_context>

<pallas_src>
import functools

import jax
import jax.numpy as jnp
from jax.experimental import pallas as pl
from jax.experimental.pallas import tpu as pltpu


def _round_up(x, m):
    return ((x + m - 1) // m) * m


def _cdiv(a, b):
    return -(-a // b)


def _num_tensorcores():
    """2 on v7x (megacore), else 1.  Detection failure degrades gracefully."""
    try:
        kind = jax.devices()[0].device_kind.lower()
    except Exception:
        return 1
    return 2 if ("v7" in kind or "7x" in kind) else 1


# ---------------------------------------------------------------------------
# Pallas kernel 1: conv-as-matmul (bf16 in, f32 acc) + fused BN statistics.
# Grid: (OCp//tn "parallel", Mp//tm "arbitrary").  The per-channel sum / sumsq
# accumulators and the [scale; shift] output are resident across the M axis.
# ---------------------------------------------------------------------------
def _conv_bn_stats_kernel(p_ref, w_ref, g_ref, b_ref,      # inputs
                          y_ref, ss_ref,                    # outputs
                          sum_ref, sq_ref,                  # VMEM scratch (8, tn)
                          *, m_total, eps):
    i = pl.program_id(1)                                    # M axis ("arbitrary")

    @pl.when(i == 0)
    def _init():
        sum_ref[...] = jnp.zeros_like(sum_ref)
        sq_ref[...] = jnp.zeros_like(sq_ref)

    # (tm, Kp) bf16 @ (Kp, tn) bf16 -> f32 on the MXU.
    y = jnp.dot(p_ref[...], w_ref[...], preferred_element_type=jnp.float32)
    y_ref[...] = y.astype(y_ref.dtype)                      # lane-dense bf16 store

    # Partial BN sums: fold tm rows onto 8 sublanes with pure VPU adds (no
    # per-step cross-sublane reduction).  Padded rows are exactly zero.
    tm, tn = y.shape
    y3 = y.reshape(tm // 8, 8, tn)
    sum_ref[...] += jnp.sum(y3, axis=0)
    sq_ref[...] += jnp.sum(y3 * y3, axis=0)

    @pl.when(i == pl.num_programs(1) - 1)
    def _finalize():
        inv_m = 1.0 / float(m_total)
        s1 = jnp.sum(sum_ref[...], axis=0, keepdims=True)   # (1, tn)
        s2 = jnp.sum(sq_ref[...], axis=0, keepdims=True)
        mean = s1 * inv_m
        var = jnp.maximum(s2 * inv_m - mean * mean, 0.0)    # biased batch var
        scale = g_ref[...] * jax.lax.rsqrt(var + eps)
        shift = b_ref[...] - mean * scale
        ss_ref[0:1, :] = scale
        ss_ref[1:2, :] = shift


def _conv_bn_stats(patches, w_mat, gamma, beta, *, m_total, eps, tm, tn,
                   vmem_limit):
    Mp, Kp = patches.shape
    OCp = w_mat.shape[1]
    n_oc = OCp // tn

    flops = 2 * Mp * Kp * OCp
    bytes_accessed = (n_oc * Mp * Kp * 2        # patch matrix (re-read per OC tile)
                      + Kp * OCp * 2            # weights
                      + Mp * OCp * 2            # y (bf16)
                      + 6 * OCp * 4)

    return pl.pallas_call(
        functools.partial(_conv_bn_stats_kernel, m_total=m_total, eps=eps),
        out_shape=(jax.ShapeDtypeStruct((Mp, OCp), jnp.bfloat16),
                   jax.ShapeDtypeStruct((2, OCp), jnp.float32)),
        grid_spec=pltpu.PrefetchScalarGridSpec(
            num_scalar_prefetch=0,
            grid=(n_oc, Mp // tm),
            in_specs=[
                pl.BlockSpec((tm, Kp), lambda j, i: (i, 0)),    # patch tile
                pl.BlockSpec((Kp, tn), lambda j, i: (0, j)),    # weight tile
                pl.BlockSpec((1, tn), lambda j, i: (0, j)),     # gamma
                pl.BlockSpec((1, tn), lambda j, i: (0, j)),     # beta
            ],
            out_specs=[
                pl.BlockSpec((tm, tn), lambda j, i: (i, j)),    # y (bf16)
                pl.BlockSpec((2, tn), lambda j, i: (0, j)),     # [scale; shift]
            ],
            scratch_shapes=[pltpu.VMEM((8, tn), jnp.float32),   # partial sum
                            pltpu.VMEM((8, tn), jnp.float32)],  # partial sumsq
        ),
        compiler_params=pltpu.CompilerParams(
            dimension_semantics=("parallel", "arbitrary"),
            vmem_limit_bytes=vmem_limit),
        cost_estimate=pl.CostEstimate(flops=flops, transcendentals=OCp,
                                      bytes_accessed=bytes_accessed),
    )(patches, w_mat, gamma, beta)


# ---------------------------------------------------------------------------
# Pallas kernel 2: apply precomputed per-channel scale/shift + activation,
# writing a channel-major (OCp, Mp) slab (tile transposed in-register) so the
# wrapper never needs a minor-dim NHWC->NCHW transpose.
# ---------------------------------------------------------------------------
def _bn_apply_kernel(y_ref, ss_ref, o_ref, *, neg_slope):
    y = y_ref[...].astype(jnp.float32)
    out = y * ss_ref[0:1, :] + ss_ref[1:2, :]
    out = jnp.where(out > 0, out, neg_slope * out)          # ReLU if slope == 0
    o_ref[...] = out.T                                      # (OCp, tm) store


def _bn_apply(y, ss, *, neg_slope, tm, vmem_limit):
    Mp, OCp = y.shape
    return pl.pallas_call(
        functools.partial(_bn_apply_kernel, neg_slope=neg_slope),
        out_shape=jax.ShapeDtypeStruct((OCp, Mp), jnp.float32),
        grid_spec=pltpu.PrefetchScalarGridSpec(
            num_scalar_prefetch=0,
            grid=(Mp // tm,),
            in_specs=[
                pl.BlockSpec((tm, OCp), lambda i: (i, 0)),
                pl.BlockSpec((2, OCp), lambda i: (0, 0)),
            ],
            out_specs=pl.BlockSpec((OCp, tm), lambda i: (0, i)),
        ),
        compiler_params=pltpu.CompilerParams(
            dimension_semantics=("parallel",),
            vmem_limit_bytes=vmem_limit),
    )(y, ss)


# ---------------------------------------------------------------------------
# Glue: im2col (NCHW -> (M, K) patches), K ordered (c, kh, kw) to match
# torch's weight.reshape(OC, C*KH*KW).
# TODO(synk): fuse im2col into kernel 1 via manual DMA of shifted NHWC row
# tiles instead of materializing the KH*KW-inflated patch matrix in HBM.
# ---------------------------------------------------------------------------
def _im2col(x, kh, kw, *, stride, padding, dilation):
    N, C, H, W = x.shape
    oh = (H + 2 * padding - dilation * (kh - 1) - 1) // stride + 1
    ow = (W + 2 * padding - dilation * (kw - 1) - 1) // stride + 1
    xp = jnp.pad(x, ((0, 0), (0, 0), (padding, padding), (padding, padding)))

    cols = []
    for i in range(kh):
        for j in range(kw):
            h0 = i * dilation
            w0 = j * dilation
            cols.append(
                xp[:, :, h0:h0 + stride * oh:stride, w0:w0 + stride * ow:stride]
            )                                          # (N, C, OH, OW)
    patches = jnp.stack(cols, axis=2)                  # (N, C, KH*KW, OH, OW)
    patches = patches.reshape(N, C * kh * kw, oh, ow)  # K ordered (c, kh, kw)
    patches = patches.transpose(0, 2, 3, 1).reshape(N * oh * ow, C * kh * kw)
    return patches, oh, ow


# ---------------------------------------------------------------------------
# Module-equivalent wrapper
# ---------------------------------------------------------------------------
class Conv2dPallas:
    """Conv2d -> BatchNorm2d (training-mode batch stats) -> ReLU/LeakyReLU(0.1)."""

    _VMEM_BUDGET = 40 * 1024 * 1024     # planning budget for tiles
    _VMEM_LIMIT = 48 * 1024 * 1024      # scoped limit requested from Mosaic

    def __init__(self, in_channels, out_channels, kernel_size,
                 padding=0, stride=1, dilation=1, leakyReLU=False,
                 eps=1e-5, key=None):
        if isinstance(kernel_size, int):
            kernel_size = (kernel_size, kernel_size)
        self.kh, self.kw = kernel_size
        self.stride, self.padding, self.dilation = stride, padding, dilation
        self.neg_slope = 0.1 if leakyReLU else 0.0
        self.eps = eps
        self.out_channels = out_channels
        self._num_tc = _num_tensorcores()

        key = jax.random.PRNGKey(0) if key is None else key
        kw_, _ = jax.random.split(key)
        fan_in = in_channels * self.kh * self.kw
        bound = 1.0 / (fan_in ** 0.5)
        weight = jax.random.uniform(
            kw_, (out_channels, in_channels, self.kh, self.kw),
            dtype=jnp.float32, minval=-bound, maxval=bound)
        # NOTE: the nn.Conv2d bias is dropped — BatchNorm's mean subtraction
        # cancels a constant per-channel bias exactly, so it is dead work.

        K = in_channels * self.kh * self.kw
        self.K = K
        self.Kp = _round_up(K, 128)                  # lane-dense patch tiles
        self.OCp = _round_up(out_channels, 128)      # lane-dense y stores

        # Pre-transpose / pad / cast the weight ONCE (not per call).
        w_mat = weight.reshape(out_channels, K).T    # (K, OC)
        w_mat = jnp.pad(w_mat,
                        ((0, self.Kp - K), (0, self.OCp - out_channels)))
        self.w_mat = w_mat.astype(jnp.bfloat16)      # (Kp, OCp) bf16

        gamma = jnp.ones((out_channels,), jnp.float32)   # BatchNorm2d defaults
        beta = jnp.zeros((out_channels,), jnp.float32)
        self.gamma = jnp.pad(gamma, (0, self.OCp - out_channels),
                             constant_values=1.0).reshape(1, self.OCp)
        self.beta = jnp.pad(beta, (0, self.OCp - out_channels)
                            ).reshape(1, self.OCp)

    # -- tiling -------------------------------------------------------------
    def _pick_conv_tiles(self, M):
        Kp, OCp = self.Kp, self.OCp
        budget = self._VMEM_BUDGET

        # Single OC block streams the patch matrix exactly once (best for one
        # TensorCore); split only for v7x megacore or to fit resident weights.
        tn = OCp
        if self._num_tc >= 2 and OCp >= 256:
            tn = OCp // 2 if OCp % 256 == 0 else 128

        def need(tm_, tn_):
            return (2 * tm_ * Kp * 2        # patch tile   (bf16, 2 buffers)
                    + 2 * Kp * tn_ * 2      # weight tile  (bf16, 2 buffers)
                    + 2 * tm_ * tn_ * 2     # y tile       (bf16, 2 buffers)
                    + 2 * 8 * tn_ * 4       # stats scratch (sum + sumsq)
                    + 2 * 4 * tn_ * 4)      # gamma / beta / [scale; shift]

        tm = 512
        while need(tm, tn) > budget:
            if tn > 128:                    # shrink resident weights first
                half = tn // 2
                tn = half if (half % 128 == 0 and OCp % half == 0) else 128
            elif tm > 128:
                tm //= 2
            else:
                break                       # floor reached; raise limit below

        # Minimize dead-row padding: tm ~ M / ceil(M / tm), rounded up to 128.
        n_steps = _cdiv(M, tm)
        tm = min(tm, _round_up(_cdiv(M, n_steps), 128))
        Mp = _round_up(M, tm)

        vmem_limit = int(min(max(self._VMEM_LIMIT, need(tm, tn) + (8 << 20)),
                             60 << 20))
        return tm, tn, Mp, vmem_limit

    def _pick_apply_tile(self, Mp, tm):
        OCp = self.OCp
        budget = self._VMEM_BUDGET
        tm_a = tm
        while (2 * tm_a * OCp * 2 + 2 * OCp * tm_a * 4 + 4 * OCp * 4) > budget \
                and tm_a > 128:
            tm_a //= 2
            if tm_a % 128 != 0 or Mp % tm_a != 0:
                tm_a = 128
                break
        return max(tm_a, 128)

    # -- forward ------------------------------------------------------------
    def __call__(self, x):
        N = x.shape[0]
        # bf16 im2col feeds the MXU its native dtype and halves patch bytes.
        patches, oh, ow = _im2col(
            x.astype(jnp.bfloat16), self.kh, self.kw,
            stride=self.stride, padding=self.padding, dilation=self.dilation)
        M = patches.shape[0]

        tm, tn, Mp, vmem_limit = self._pick_conv_tiles(M)
        patches = jnp.pad(patches, ((0, Mp - M), (0, self.Kp - self.K)))

        y, ss = _conv_bn_stats(patches, self.w_mat, self.gamma, self.beta,
                               m_total=M, eps=self.eps, tm=tm, tn=tn,
                               vmem_limit=vmem_limit)

        tm_a = self._pick_apply_tile(Mp, tm)
        act_cm = _bn_apply(y, ss, neg_slope=self.neg_slope, tm=tm_a,
                           vmem_limit=vmem_limit)            # (OCp, Mp) f32

        # Channel-major slab -> NCHW: only a leading-axis swap over contiguous
        # OH*OW blocks (the minor-dim transpose already happened in kernel 2).
        out = act_cm[:self.out_channels, :M]
        out = out.reshape(self.out_channels, N, oh, ow).transpose(1, 0, 2, 3)
        return out                                            # NCHW, f32


if __name__ == "__main__":
    key = jax.random.PRNGKey(0)
    k_x, k_p = jax.random.split(key)

    x = jax.random.normal(k_x, (2, 4, 16, 16), dtype=jnp.float32)   # NCHW

    module = Conv2dPallas(in_channels=4, out_channels=8, kernel_size=3,
                          padding=1, stride=1, dilation=1,
                          leakyReLU=False, key=k_p)

    y = module(x)
    jax.block_until_ready(y)
    assert y.shape == (2, 8, 16, 16), y.shape
    assert bool(jnp.all(y >= 0.0))           # ReLU output is non-negative
    assert bool(jnp.all(jnp.isfinite(y)))
    print("KERNEL_OK")
</pallas_src>

<mosaic_0001>
module attributes {stable_mosaic.version = 11 : i64} {
  func.func @_conv_bn_stats_kernel(%arg0: i32, %arg1: i32, %arg2: memref<512x128xbf16, #tpu.memory_space<vmem>>, %arg3: memref<128x128xbf16, #tpu.memory_space<vmem>>, %arg4: memref<1x128xf32, #tpu.memory_space<vmem>>, %arg5: memref<1x128xf32, #tpu.memory_space<vmem>>, %arg6: memref<512x128xbf16, #tpu.memory_space<vmem>>, %arg7: memref<2x128xf32, #tpu.memory_space<vmem>>, %arg8: memref<8x128xf32, #tpu.memory_space<vmem>>, %arg9: memref<8x128xf32, #tpu.memory_space<vmem>>) attributes {dimension_semantics = [#tpu.dimension_semantics<parallel>, #tpu.dimension_semantics<arbitrary>], iteration_bounds = array<i64: 1, 1>, scalar_prefetch = 0 : i64, scratch_operands = 2 : i64, tpu.core_type = #tpu.core_type<tc>, window_params = [{transform_indices = @transform_0, window_bounds = array<i64: 512, 128>}, {transform_indices = @transform_1, window_bounds = array<i64: 128, 128>}, {transform_indices = @transform_2, window_bounds = array<i64: 1, 128>}, {transform_indices = @transform_3, window_bounds = array<i64: 1, 128>}, {transform_indices = @transform_4, window_bounds = array<i64: 512, 128>}, {transform_indices = @transform_5, window_bounds = array<i64: 2, 128>}]} {
    %c0_i32 = arith.constant 0 : i32
    %0 = arith.cmpi eq, %arg1, %c0_i32 : i32
    %1 = arith.extui %0 : i1 to i32
    %c0_i32_0 = arith.constant 0 : i32
    %2 = arith.cmpi ne, %1, %c0_i32_0 : i32
    scf.if %2 {
      %cst_18 = arith.constant 0.000000e+00 : f32
      %21 = vector.broadcast %cst_18 : f32 to vector<8x128xf32>
      %c0_19 = arith.constant 0 : index
      %c0_20 = arith.constant 0 : index
      %22 = vector.load %arg8[%c0_19, %c0_20] : memref<8x128xf32, #tpu.memory_space<vmem>>, vector<8x128xf32>
      tpu.vector_store %arg8[%c0_19, %c0_20], %21 {strides = array<i32>} : memref<8x128xf32, #tpu.memory_space<vmem>>, vector<8x128xf32>,
      %cst_21 = arith.constant 0.000000e+00 : f32
      %23 = vector.broadcast %cst_21 : f32 to vector<8x128xf32>
      %c0_22 = arith.constant 0 : index
      %c0_23 = arith.constant 0 : index
      %24 = vector.load %arg9[%c0_22, %c0_23] : memref<8x128xf32, #tpu.memory_space<vmem>>, vector<8x128xf32>
      tpu.vector_store %arg9[%c0_22, %c0_23], %23 {strides = array<i32>} : memref<8x128xf32, #tpu.memory_space<vmem>>, vector<8x128xf32>,
    } else {
    }
    %c0 = arith.constant 0 : index
    %c0_1 = arith.constant 0 : index
    %3 = vector.load %arg2[%c0, %c0_1] : memref<512x128xbf16, #tpu.memory_space<vmem>>, vector<512x128xbf16>
    %c0_2 = arith.constant 0 : index
    %c0_3 = arith.constant 0 : index
    %4 = vector.load %arg3[%c0_2, %c0_3] : memref<128x128xbf16, #tpu.memory_space<vmem>>, vector<128x128xbf16>
    %cst = arith.constant dense<0.000000e+00> : vector<512x128xf32>
    %5 = tpu.matmul %3, %4, %cst {dimension_numbers = #tpu.dot_dimension_numbers<[1], [0], [0], [1], [0, 0, 1, 1], [], []>} : vector<512x128xbf16>, vector<128x128xbf16>, vector<512x128xf32> -> vector<512x128xf32>
    %6 = arith.truncf %5 : vector<512x128xf32> to vector<512x128xbf16>
    %c0_4 = arith.constant 0 : index
    %c0_5 = arith.constant 0 : index
    %7 = vector.load %arg6[%c0_4, %c0_5] : memref<512x128xbf16, #tpu.memory_space<vmem>>, vector<512x128xbf16>
    tpu.vector_store %arg6[%c0_4, %c0_5], %6 {strides = array<i32>} : memref<512x128xbf16, #tpu.memory_space<vmem>>, vector<512x128xbf16>,
    %8 = vector.shape_cast %5 : vector<512x128xf32> to vector<64x8x128xf32>
    %c0_6 = arith.constant 0 : index
    %c0_7 = arith.constant 0 : index
    %9 = vector.load %arg8[%c0_6, %c0_7] : memref<8x128xf32, #tpu.memory_space<vmem>>, vector<8x128xf32>
    %cst_8 = arith.constant dense<0.000000e+00> : vector<8x128xf32>
    %10 = vector.multi_reduction <add>, %8, %cst_8 [0] : vector<64x8x128xf32> to vector<8x128xf32>
    %11 = arith.addf %9, %10 : vector<8x128xf32>
    %c0_9 = arith.constant 0 : index
    %c0_10 = arith.constant 0 : index
    %12 = vector.load %arg8[%c0_9, %c0_10] : memref<8x128xf32, #tpu.memory_space<vmem>>, vector<8x128xf32>
    tpu.vector_store %arg8[%c0_9, %c0_10], %11 {strides = array<i32>} : memref<8x128xf32, #tpu.memory_space<vmem>>, vector<8x128xf32>,
    %c0_11 = arith.constant 0 : index
    %c0_12 = arith.constant 0 : index
    %13 = vector.load %arg9[%c0_11, %c0_12] : memref<8x128xf32, #tpu.memory_space<vmem>>, vector<8x128xf32>
    %14 = arith.mulf %8, %8 : vector<64x8x128xf32>
    %cst_13 = arith.constant dense<0.000000e+00> : vector<8x128xf32>
    %15 = vector.multi_reduction <add>, %14, %cst_13 [0] : vector<64x8x128xf32> to vector<8x128xf32>
    %16 = arith.addf %13, %15 : vector<8x128xf32>
    %c0_14 = arith.constant 0 : index
    %c0_15 = arith.constant 0 : index
    %17 = vector.load %arg9[%c0_14, %c0_15] : memref<8x128xf32, #tpu.memory_space<vmem>>, vector<8x128xf32>
    tpu.vector_store %arg9[%c0_14, %c0_15], %16 {strides = array<i32>} : memref<8x128xf32, #tpu.memory_space<vmem>>, vector<8x128xf32>,
    %c0_i32_16 = arith.constant 0 : i32
    %18 = arith.cmpi eq, %arg1, %c0_i32_16 : i32
    %19 = arith.extui %18 : i1 to i32
    %c0_i32_17 = arith.constant 0 : i32
    %20 = arith.cmpi ne, %19, %c0_i32_17 : i32
    scf.if %20 {
      %c0_18 = arith.constant 0 : index
      %c0_19 = arith.constant 0 : index
      %21 = vector.load %arg8[%c0_18, %c0_19] : memref<8x128xf32, #tpu.memory_space<vmem>>, vector<8x128xf32>
      %cst_20 = arith.constant dense<0.000000e+00> : vector<128xf32>
      %22 = vector.multi_reduction <add>, %21, %cst_20 [0] : vector<8x128xf32> to vector<128xf32>
      %23 = vector.shape_cast %22 : vector<128xf32> to vector<1x128xf32>
      %c0_21 = arith.constant 0 : index
      %c0_22 = arith.constant 0 : index
      %24 = vector.load %arg9[%c0_21, %c0_22] : memref<8x128xf32, #tpu.memory_space<vmem>>, vector<8x128xf32>
      %cst_23 = arith.constant dense<0.000000e+00> : vector<128xf32>
      %25 = vector.multi_reduction <add>, %24, %cst_23 [0] : vector<8x128xf32> to vector<128xf32>
      %26 = vector.shape_cast %25 : vector<128xf32> to vector<1x128xf32>
      %cst_24 = arith.constant 0.001953125 : f32
      %27 = vector.broadcast %cst_24 : f32 to vector<1x128xf32>
      %28 = arith.mulf %23, %27 : vector<1x128xf32>
      %cst_25 = arith.constant 0.001953125 : f32
      %29 = vector.broadcast %cst_25 : f32 to vector<1x128xf32>
      %30 = arith.mulf %26, %29 : vector<1x128xf32>
      %31 = arith.mulf %28, %28 : vector<1x128xf32>
      %32 = arith.subf %30, %31 : vector<1x128xf32>
      %cst_26 = arith.constant 0.000000e+00 : f32
      %33 = vector.broadcast %cst_26 : f32 to vector<1x128xf32>
      %34 = arith.maximumf %32, %33 : vector<1x128xf32>
      %c0_27 = arith.constant 0 : index
      %c0_28 = arith.constant 0 : index
      %35 = vector.load %arg4[%c0_27, %c0_28] : memref<1x128xf32, #tpu.memory_space<vmem>>, vector<1x128xf32>
      %cst_29 = arith.constant 9.99999974E-6 : f32
      %36 = vector.broadcast %cst_29 : f32 to vector<1x128xf32>
      %37 = arith.addf %34, %36 : vector<1x128xf32>
      %38 = math.rsqrt %37 : vector<1x128xf32>
      %39 = arith.mulf %35, %38 : vector<1x128xf32>
      %c0_30 = arith.constant 0 : index
      %c0_31 = arith.constant 0 : index
      %40 = vector.load %arg5[%c0_30, %c0_31] : memref<1x128xf32, #tpu.memory_space<vmem>>, vector<1x128xf32>
      %41 = arith.mulf %28, %39 : vector<1x128xf32>
      %42 = arith.subf %40, %41 : vector<1x128xf32>
      %c0_32 = arith.constant 0 : index
      %c0_33 = arith.constant 0 : index
      %43 = vector.load %arg7[%c0_32, %c0_33] : memref<2x128xf32, #tpu.memory_space<vmem>>, vector<1x128xf32>
      tpu.vector_store %arg7[%c0_32, %c0_33], %39 {strides = array<i32>} : memref<2x128xf32, #tpu.memory_space<vmem>>, vector<1x128xf32>,
      %c1 = arith.constant 1 : index
      %c0_34 = arith.constant 0 : index
      %44 = vector.load %arg7[%c1, %c0_34] : memref<2x128xf32, #tpu.memory_space<vmem>>, vector<1x128xf32>
      tpu.vector_store %arg7[%c1, %c0_34], %42 {strides = array<i32>} : memref<2x128xf32, #tpu.memory_space<vmem>>, vector<1x128xf32>,
    } else {
    }
    return
  }
  func.func @transform_0(%arg0: i32, %arg1: i32) -> (i32, i32) {
    %c0_i32 = arith.constant 0 : i32
    %c0_i32_0 = arith.constant 0 : i32
    return %arg1, %c0_i32 : i32, i32
  }
  func.func @transform_1(%arg0: i32, %arg1: i32) -> (i32, i32) {
    %c0_i32 = arith.constant 0 : i32
    %c0_i32_0 = arith.constant 0 : i32
    return %c0_i32, %arg0 : i32, i32
  }
  func.func @transform_2(%arg0: i32, %arg1: i32) -> (i32, i32) {
    %c0_i32 = arith.constant 0 : i32
    %c0_i32_0 = arith.constant 0 : i32
    return %c0_i32, %arg0 : i32, i32
  }
  func.func @transform_3(%arg0: i32, %arg1: i32) -> (i32, i32) {
    %c0_i32 = arith.constant 0 : i32
    %c0_i32_0 = arith.constant 0 : i32
    return %c0_i32, %arg0 : i32, i32
  }
  func.func @transform_4(%arg0: i32, %arg1: i32) -> (i32, i32) {
    %c0_i32 = arith.constant 0 : i32
    return %arg1, %arg0 : i32, i32
  }
  func.func @transform_5(%arg0: i32, %arg1: i32) -> (i32, i32) {
    %c0_i32 = arith.constant 0 : i32
    %c0_i32_0 = arith.constant 0 : i32
    return %c0_i32, %arg0 : i32, i32
  }
}

</mosaic_0001>

<llo_original>
// kernel: tpu_custom_call.1
$region0: #{tpu_custom_call.1}
  #allocation0 [shape = 'u32[]', space=smem, size = 0x4, offset = 0x4, fixed_abs, tag = 'smem constant byte address 0x4 - core index']
  #allocation1 [shape = 'u32[144,128]{1,0:T(1,128)}', space=vmem, size = 0x12000, scoped, tag = 'internal scratch']
  #allocation2 [shape = 'f32[8,128]{1,0:T(8,128)}', space=vmem, size = 0x1000, scoped, tag = 'scratch operand']
  #allocation3 [shape = 'f32[8,128]{1,0:T(8,128)}', space=vmem, size = 0x1000, scoped, tag = 'scratch operand']
  %s0 = inlined_call_operand.hbm [shape: bf16[512,128], index: 0, kind: input, shape index: {}]
  %s1 = inlined_call_operand.hbm [shape: bf16[128,128], index: 1, kind: input, shape index: {}]
  %s2 = inlined_call_operand.vmem [shape: f32[1,128], index: 2, kind: input, shape index: {}]
  %s3 = inlined_call_operand.vmem [shape: f32[1,128], index: 3, kind: input, shape index: {}]
  %s4 = inlined_call_operand.hbm [shape: bf16[512,128], index: 4, kind: output, shape index: {0}]
  %s5 = inlined_call_operand.hbm [shape: f32[2,128], index: 5, kind: output, shape index: {1}]
  %6 = xla_tuple %s4, %s5
  %s7 = sld [smem:[#allocation0]]
  $region50: #{tpu_custom_call.1} parent=0
    _
  %s9 = ssub.s32 1, %s7
  %s10 = scalar_select 0, %s9, %s7
  $region1: #{tpu_custom_call.1} parent=0
    #allocation4 [shape = 'u8[131072]{0}', space=vmem, size = 0x20000, scoped, tag = 'input window, operand 0, single buffered']
    #allocation5 [shape = 's32[1]{0}', space=sflag, size = 0x4, scoped, tag = 'scoped memory for tpu_custom_call.1']
    #allocation6 [shape = 's32[1]{0}', space=sflag, size = 0x4, scoped, tag = 'scoped memory for tpu_custom_call.1']
    #allocation7 [shape = 'u8[32768]{0}', space=vmem, size = 0x8000, scoped, tag = 'input window, operand 1, single buffered']
    #allocation8 [shape = 's32[1]{0}', space=sflag, size = 0x4, scoped, tag = 'scoped memory for tpu_custom_call.1']
    #allocation9 [shape = 'u8[131072]{0}', space=vmem, size = 0x20000, scoped, tag = 'output window, operand 0, single buffered']
    #allocation10 [shape = 'u8[1024]{0}', space=vmem, size = 0x400, scoped, tag = 'output window, operand 1, single buffered']
    #allocation11 [shape = 's32[1]{0}', space=sflag, size = 0x4, scoped, tag = 'scoped memory for tpu_custom_call.1']
    %11 = vsyncpa [#allocation5], 0
    %12 = vsyncpa [#allocation8], 0
    %13 = vsyncpa [#allocation6], 0
    %14 = vsyncpa [#allocation11], 0
    // Predicated region
    $region2: #{tpu_custom_call.1} parent=1 // pred_check
      _
    $region3: #{tpu_custom_call.1} parent=1 // pred_check_branch
      %16 = sbr.rel (0) target = $region5
    $region4: #{tpu_custom_call.1} parent=1 // pred_region
      %s18 = ssub.s32 4096, 4096
      %19 = vsyncadd [#allocation5], %s18
      %s20 = sshll.u32 [#allocation4], 4
      %s21 = int_to_ptr.vmem [resolvable:$true] %s20
      %26 = dma.hbm_to_vmem [thread:$0]  %s0, 4096, %s21, [#allocation5], 64, 64, 4
    $region5: #{tpu_custom_call.1} parent=1 // pred_fallthru
      _
    // Predicated region
    $region6: #{tpu_custom_call.1} parent=1 // pred_check
      _
    $region7: #{tpu_custom_call.1} parent=1 // pred_check_branch
      %28 = sbr.rel (0) target = $region9
    $region8: #{tpu_custom_call.1} parent=1 // pred_region
      %s30 = ssub.s32 1024, 1024
      %31 = vsyncadd [#allocation8], %s30
      %s32 = sshll.u32 [#allocation7], 4
      %s33 = int_to_ptr.vmem [resolvable:$true] %s32
      %38 = dma.hbm_to_vmem [thread:$0]  %s1, 1024, %s33, [#allocation8], 64, 64, 4
    $region9: #{tpu_custom_call.1} parent=1 // pred_fallthru
      _
    // Predicated region
    $region10: #{tpu_custom_call.1} parent=1 // pred_check
      _
    $region11: #{tpu_custom_call.1} parent=1 // pred_check_branch
      %40 = sbr.rel (0) target = $region13
    $region12: #{tpu_custom_call.1} parent=1 // pred_region
      _
    $region13: #{tpu_custom_call.1} parent=1 // pred_fallthru
      _
    // Predicated region
    $region14: #{tpu_custom_call.1} parent=1 // pred_check
      _
    $region15: #{tpu_custom_call.1} parent=1 // pred_check_branch
      %42 = sbr.rel (0) target = $region17
    $region16: #{tpu_custom_call.1} parent=1 // pred_region
      _
    $region17: #{tpu_custom_call.1} parent=1 // pred_fallthru
      _
    // Predicated region
    $region18: #{tpu_custom_call.1} parent=1 // pred_check
      _
    $region19: #{tpu_custom_call.1} parent=1 // pred_check_branch
      %44 = sbr.rel (0) target = $region21
    $region20: #{tpu_custom_call.1} parent=1 // pred_region
      %45 = dma.done [#allocation5], 4096
    $region21: #{tpu_custom_call.1} parent=1 // pred_fallthru
      _
    // Predicated region
    $region22: #{tpu_custom_call.1} parent=1 // pred_check
      _
    $region23: #{tpu_custom_call.1} parent=1 // pred_check_branch
      %47 = sbr.rel (0) target = $region25
    $region24: #{tpu_custom_call.1} parent=1 // pred_region
      %48 = dma.done [#allocation8], 1024
    $region25: #{tpu_custom_call.1} parent=1 // pred_fallthru
      _
    %p50 = scmp.eq.s32.totalorder 0, 0
    // Predicated region
    $region26: #{tpu_custom_call.1} parent=1 // pred_check
      %p51 = pneg %p50
    $region27: #{tpu_custom_call.1} parent=1 // pred_check_branch
      %53 = sbr.rel (%p51) target = $region29
    $region28: #{tpu_custom_call.1} parent=1 // pred_region
      %54 = vst [vmem:[#allocation2] sm:$0xff] 0.0
      %55 = vst [vmem:[#allocation3] sm:$0xff] 0.0
    $region29: #{tpu_custom_call.1} parent=1 // pred_fallthru
      _
    %v56 = vld [vmem:[#allocation4] sm:$0xf]
    %v57 = vld [vmem:[#allocation4 + $0x4] sm:$0xf]
    %v58 = vld [vmem:[#allocation4 + $0x8] sm:$0xf]
    %v59 = vld [vmem:[#allocation4 + $0xc] sm:$0xf]
    %v60 = vld [vmem:[#allocation4 + $0x10] sm:$0xf]
    %v61 = vld [vmem:[#allocation4 + $0x14] sm:$0xf]
    %v62 = vld [vmem:[#allocation4 + $0x18] sm:$0xf]
    %v63 = vld [vmem:[#allocation4 + $0x1c] sm:$0xf]
    %v64 = vld [vmem:[#allocation4 + $0x20] sm:$0xf]
    %v65 = vld [vmem:[#allocation4 + $0x24] sm:$0xf]
    %v66 = vld [vmem:[#allocation4 + $0x28] sm:$0xf]
    %v67 = vld [vmem:[#allocation4 + $0x2c] sm:$0xf]
    %v68 = vld [vmem:[#allocation4 + $0x30] sm:$0xf]
    %v69 = vld [vmem:[#allocation4 + $0x34] sm:$0xf]
    %v70 = vld [vmem:[#allocation4 + $0x38] sm:$0xf]
    %v71 = vld [vmem:[#allocation4 + $0x3c] sm:$0xf]
    %v72 = vld [vmem:[#allocation4 + $0x40] sm:$0xf]
    %v73 = vld [vmem:[#allocation4 + $0x44] sm:$0xf]
    %v74 = vld [vmem:[#allocation4 + $0x48] sm:$0xf]
    %v75 = vld [vmem:[#allocation4 + $0x4c] sm:$0xf]
    %v76 = vld [vmem:[#allocation4 + $0x50] sm:$0xf]
    %v77 = vld [vmem:[#allocation4 + $0x54] sm:$0xf]
    %v78 = vld [vmem:[#allocation4 + $0x58] sm:$0xf]
    %v79 = vld [vmem:[#allocation4 + $0x5c] sm:$0xf]
    %v80 = vld [vmem:[#allocation4 + $0x60] sm:$0xf]
    %v81 = vld [vmem:[#allocation4 + $0x64] sm:$0xf]
    %v82 = vld [vmem:[#allocation4 + $0x68] sm:$0xf]
    %v83 = vld [vmem:[#allocation4 + $0x6c] sm:$0xf]
    %v84 = vld [vmem:[#allocation4 + $0x70] sm:$0xf]
    %v85 = vld [vmem:[#allocation4 + $0x74] sm:$0xf]
    %v86 = vld [vmem:[#allocation4 + $0x78] sm:$0xf]
    %v87 = vld [vmem:[#allocation4 + $0x7c] sm:$0xf]
    %v88 = vld [vmem:[#allocation4 + $0x80] sm:$0xf]
    %v89 = vld [vmem:[#allocation4 + $0x84] sm:$0xf]
    %v90 = vld [vmem:[#allocation4 + $0x88] sm:$0xf]
    %v91 = vld [vmem:[#allocation4 + $0x8c] sm:$0xf]
    %v92 = vld [vmem:[#allocation4 + $0x90] sm:$0xf]
    %v93 = vld [vmem:[#allocation4 + $0x94] sm:$0xf]
    %v94 = vld [vmem:[#allocation4 + $0x98] sm:$0xf]
    %v95 = vld [vmem:[#allocation4 + $0x9c] sm:$0xf]
    %v96 = vld [vmem:[#allocation4 + $0xa0] sm:$0xf]
    %v97 = vld [vmem:[#allocation4 + $0xa4] sm:$0xf]
    %v98 = vld [vmem:[#allocation4 + $0xa8] sm:$0xf]
    %v99 = vld [vmem:[#allocation4 + $0xac] sm:$0xf]
    %v100 = vld [vmem:[#allocation4 + $0xb0] sm:$0xf]
    %v101 = vld [vmem:[#allocation4 + $0xb4] sm:$0xf]
    %v102 = vld [vmem:[#allocation4 + $0xb8] sm:$0xf]
    %v103 = vld [vmem:[#allocation4 + $0xbc] sm:$0xf]
    %v104 = vld [vmem:[#allocation4 + $0xc0] sm:$0xf]
    %v105 = vld [vmem:[#allocation4 + $0xc4] sm:$0xf]
    %v106 = vld [vmem:[#allocation4 + $0xc8] sm:$0xf]
    %v107 = vld [vmem:[#allocation4 + $0xcc] sm:$0xf]
    %v108 = vld [vmem:[#allocation4 + $0xd0] sm:$0xf]
    %v109 = vld [vmem:[#allocation4 + $0xd4] sm:$0xf]
    %v110 = vld [vmem:[#allocation4 + $0xd8] sm:$0xf]
    %v111 = vld [vmem:[#allocation4 + $0xdc] sm:$0xf]
    %v112 = vld [vmem:[#allocation4 + $0xe0] sm:$0xf]
    %v113 = vld [vmem:[#allocation4 + $0xe4] sm:$0xf]
    %v114 = vld [vmem:[#allocation4 + $0xe8] sm:$0xf]
    %v115 = vld [vmem:[#allocation4 + $0xec] sm:$0xf]
    %v116 = vld [vmem:[#allocation4 + $0xf0] sm:$0xf]
    %v117 = vld [vmem:[#allocation4 + $0xf4] sm:$0xf]
    %v118 = vld [vmem:[#allocation4 + $0xf8] sm:$0xf]
    %v119 = vld [vmem:[#allocation4 + $0xfc] sm:$0xf]
    %v120 = vld [vmem:[#allocation7] sm:$0xf]
    %v121 = vld [vmem:[#allocation7 + $0x4] sm:$0xf]
    %v122 = vld [vmem:[#allocation7 + $0x8] sm:$0xf]
    %v123 = vld [vmem:[#allocation7 + $0xc] sm:$0xf]
    %v124 = vld [vmem:[#allocation7 + $0x10] sm:$0xf]
    %v125 = vld [vmem:[#allocation7 + $0x14] sm:$0xf]
    %v126 = vld [vmem:[#allocation7 + $0x18] sm:$0xf]
    %v127 = vld [vmem:[#allocation7 + $0x1c] sm:$0xf]
    %v128 = vld [vmem:[#allocation7 + $0x20] sm:$0xf]
    %v129 = vld [vmem:[#allocation7 + $0x24] sm:$0xf]
    %v130 = vld [vmem:[#allocation7 + $0x28] sm:$0xf]
    %v131 = vld [vmem:[#allocation7 + $0x2c] sm:$0xf]
    %v132 = vld [vmem:[#allocation7 + $0x30] sm:$0xf]
    %v133 = vld [vmem:[#allocation7 + $0x34] sm:$0xf]
    %v134 = vld [vmem:[#allocation7 + $0x38] sm:$0xf]
    %v135 = vld [vmem:[#allocation7 + $0x3c] sm:$0xf]
    %v200 = vunpack.c.l.b16 %v56
    %v201 = vunpack.c.l.b16 %v57
    %v202 = vunpack.c.l.b16 %v58
    %v203 = vunpack.c.l.b16 %v59
    %v204 = vunpack.c.l.b16 %v60
    %v205 = vunpack.c.l.b16 %v61
    %v206 = vunpack.c.l.b16 %v62
    %v207 = vunpack.c.l.b16 %v63
    %v208 = vunpack.c.l.b16 %v64
    %v209 = vunpack.c.l.b16 %v65
    %v210 = vunpack.c.l.b16 %v66
    %v211 = vunpack.c.l.b16 %v67
    %v212 = vunpack.c.l.b16 %v68
    %v213 = vunpack.c.l.b16 %v69
    %v214 = vunpack.c.l.b16 %v70
    %v215 = vunpack.c.l.b16 %v71
    %v216 = vunpack.c.l.b16 %v72
    %v217 = vunpack.c.l.b16 %v73
    %v218 = vunpack.c.l.b16 %v74
    %v219 = vunpack.c.l.b16 %v75
    %v220 = vunpack.c.l.b16 %v76
    %v221 = vunpack.c.l.b16 %v77
    %v222 = vunpack.c.l.b16 %v78
    %v223 = vunpack.c.l.b16 %v79
    %v224 = vunpack.c.l.b16 %v80
    %v225 = vunpack.c.l.b16 %v81
    %v226 = vunpack.c.l.b16 %v82
    %v227 = vunpack.c.l.b16 %v83
    %v228 = vunpack.c.l.b16 %v84
    %v229 = vunpack.c.l.b16 %v85
    %v230 = vunpack.c.l.b16 %v86
    %v231 = vunpack.c.l.b16 %v87
    %v232 = vunpack.c.l.b16 %v88
    %v233 = vunpack.c.l.b16 %v89
    %v234 = vunpack.c.l.b16 %v90
    %v235 = vunpack.c.l.b16 %v91
    %v236 = vunpack.c.l.b16 %v92
    %v237 = vunpack.c.l.b16 %v93
    %v238 = vunpack.c.l.b16 %v94
    %v239 = vunpack.c.l.b16 %v95
    %v240 = vunpack.c.l.b16 %v96
    %v241 = vunpack.c.l.b16 %v97
    %v242 = vunpack.c.l.b16 %v98
    %v243 = vunpack.c.l.b16 %v99
    %v244 = vunpack.c.l.b16 %v100
    %v245 = vunpack.c.l.b16 %v101
    %v246 = vunpack.c.l.b16 %v102
    %v247 = vunpack.c.l.b16 %v103
    %v248 = vunpack.c.l.b16 %v104
    %v249 = vunpack.c.l.b16 %v105
    %v250 = vunpack.c.l.b16 %v106
    %v251 = vunpack.c.l.b16 %v107
    %v252 = vunpack.c.l.b16 %v108
    %v253 = vunpack.c.l.b16 %v109
    %v254 = vunpack.c.l.b16 %v110
    %v255 = vunpack.c.l.b16 %v111
    %v256 = vunpack.c.l.b16 %v112
    %v257 = vunpack.c.l.b16 %v113
    %v258 = vunpack.c.l.b16 %v114
    %v259 = vunpack.c.l.b16 %v115
    %v260 = vunpack.c.l.b16 %v116
    %v261 = vunpack.c.l.b16 %v117
    %v262 = vunpack.c.l.b16 %v118
    %v263 = vunpack.c.l.b16 %v119
    %v264 = vpack.c.b16 %v201, %v200
    %v265 = vpack.c.b16 %v203, %v202
    %v266 = vpack.c.b16 %v205, %v204
    %v267 = vpack.c.b16 %v207, %v206
    %v268 = vpack.c.b16 %v209, %v208
    %v269 = vpack.c.b16 %v211, %v210
    %v270 = vpack.c.b16 %v213, %v212
    %v271 = vpack.c.b16 %v215, %v214
    %v272 = vpack.c.b16 %v217, %v216
    %v273 = vpack.c.b16 %v219, %v218
    %v274 = vpack.c.b16 %v221, %v220
    %v275 = vpack.c.b16 %v223, %v222
    %v276 = vpack.c.b16 %v225, %v224
    %v277 = vpack.c.b16 %v227, %v226
    %v278 = vpack.c.b16 %v229, %v228
    %v279 = vpack.c.b16 %v231, %v230
    %v280 = vpack.c.b16 %v233, %v232
    %v281 = vpack.c.b16 %v235, %v234
    %v282 = vpack.c.b16 %v237, %v236
    %v283 = vpack.c.b16 %v239, %v238
    %v284 = vpack.c.b16 %v241, %v240
    %v285 = vpack.c.b16 %v243, %v242
    %v286 = vpack.c.b16 %v245, %v244
    %v287 = vpack.c.b16 %v247, %v246
    %v288 = vpack.c.b16 %v249, %v248
    %v289 = vpack.c.b16 %v251, %v250
    %v290 = vpack.c.b16 %v253, %v252
    %v291 = vpack.c.b16 %v255, %v254
    %v292 = vpack.c.b16 %v257, %v256
    %v293 = vpack.c.b16 %v259, %v258
    %v294 = vpack.c.b16 %v261, %v260
    %v295 = vpack.c.b16 %v263, %v262
    %v344 = vunpack.c.l.b16 %v120
    %v345 = vunpack.c.l.b16 %v121
    %v346 = vunpack.c.l.b16 %v122
    %v347 = vunpack.c.l.b16 %v123
    %v348 = vunpack.c.l.b16 %v124
    %v349 = vunpack.c.l.b16 %v125
    %v350 = vunpack.c.l.b16 %v126
    %v351 = vunpack.c.l.b16 %v127
    %v352 = vunpack.c.l.b16 %v128
    %v353 = vunpack.c.l.b16 %v129
    %v354 = vunpack.c.l.b16 %v130
    %v355 = vunpack.c.l.b16 %v131
    %v356 = vunpack.c.l.b16 %v132
    %v357 = vunpack.c.l.b16 %v133
    %v358 = vunpack.c.l.b16 %v134
    %v359 = vunpack.c.l.b16 %v135
    %v360 = vpack.c.b16 %v345, %v344
    %v361 = vpack.c.b16 %v347, %v346
    %v362 = vpack.c.b16 %v349, %v348
    %v363 = vpack.c.b16 %v351, %v350
    %v364 = vpack.c.b16 %v353, %v352
    %v365 = vpack.c.b16 %v355, %v354
    %v366 = vpack.c.b16 %v357, %v356
    %v367 = vpack.c.b16 %v359, %v358
    %376 = vmatprep.subr.bf16.mxu0 0
    %377 = vmatpush1.bf16.msra.mxu0 %v367
    %378 = vmatprep.subr.bf16.mxu0 0
    %379 = vmatpush1.bf16.msra.mxu0 %v366
    %380 = vmatprep.subr.bf16.mxu0 0
    %381 = vmatpush1.bf16.msra.mxu0 %v365
    %382 = vmatprep.subr.bf16.mxu0 0
    %383 = vmatpush1.bf16.msra.mxu0 %v364
    %384 = vmatprep.subr.bf16.mxu0 0
    %385 = vmatpush1.bf16.msra.mxu0 %v363
    %386 = vmatprep.subr.bf16.mxu0 0
    %387 = vmatpush1.bf16.msra.mxu0 %v362
    %388 = vmatprep.subr.bf16.mxu0 0
    %389 = vmatpush1.bf16.msra.mxu0 %v361
    %390 = vmatprep.subr.bf16.mxu0 0
    %391 = vmatpush1.bf16.msra.mxu0 %v360
    %392 = vmatprep.subr.bf16.mxu0 0
    %393 = vmatpush2.bf16.msra.mxu0 0
    %394 = vmatprep.subr.bf16.mxu0 0
    %395 = vmatpush2.bf16.msra.mxu0 0
    %396 = vmatprep.subr.bf16.mxu0 0
    %397 = vmatpush2.bf16.msra.mxu0 0
    %398 = vmatprep.subr.bf16.mxu0 0
    %399 = vmatpush2.bf16.msra.mxu0 0
    %400 = vmatprep.subr.bf16.mxu0 0
    %401 = vmatpush2.bf16.msra.mxu0 0
    %402 = vmatprep.subr.bf16.mxu0 0
    %403 = vmatpush2.bf16.msra.mxu0 0
    %404 = vmatprep.subr.bf16.mxu0 0
    %405 = vmatpush2.bf16.msra.mxu0 0
    %406 = vmatprep.subr.bf16.mxu0 0
    %407 = vmatpush2.bf16.msra.mxu0 0
    %408 = vmatprep.mubr.bf16.mxu0 0
    %409 = vmatmul.mubr.bf16.gmra.mxu0 %v264
    %v410 = vpop.f32.mrf.mxu0
    %v411 = vadd.f32 0.0, %v410
    %v412 = vpop.f32.mrf.mxu0
    %v413 = vpop.f32.mrf.mxu0
    %v414 = vadd.f32 0.0, %v413
    %v415 = vpop.f32.mrf.mxu0
    %416 = vmatprep.mubr.bf16.mxu0 0
    %417 = vmatmul.mubr.bf16.gmra.mxu0 %v265
    %v418 = vpop.f32.mrf.mxu0
    %v419 = vadd.f32 0.0, %v418
    %v420 = vpop.f32.mrf.mxu0
    %v421 = vpop.f32.mrf.mxu0
    %v422 = vadd.f32 0.0, %v421
    %v423 = vpop.f32.mrf.mxu0
    %424 = vmatprep.mubr.bf16.mxu0 0
    %425 = vmatmul.mubr.bf16.gmra.mxu0 %v266
    %v426 = vpop.f32.mrf.mxu0
    %v427 = vadd.f32 0.0, %v426
    %v428 = vpop.f32.mrf.mxu0
    %v429 = vpop.f32.mrf.mxu0
    %v430 = vadd.f32 0.0, %v429
    %v431 = vpop.f32.mrf.mxu0
    %432 = vmatprep.mubr.bf16.mxu0 0
    %433 = vmatmul.mubr.bf16.gmra.mxu0 %v267
    %v434 = vpop.f32.mrf.mxu0
    %v435 = vadd.f32 0.0, %v434
    %v436 = vpop.f32.mrf.mxu0
    %v437 = vpop.f32.mrf.mxu0
    %v438 = vadd.f32 0.0, %v437
    %v439 = vpop.f32.mrf.mxu0
    %440 = vmatprep.mubr.bf16.mxu0 0
    %441 = vmatmul.mubr.bf16.gmra.mxu0 %v268
    %v442 = vpop.f32.mrf.mxu0
    %v443 = vadd.f32 0.0, %v442
    %v444 = vpop.f32.mrf.mxu0
    %v445 = vpop.f32.mrf.mxu0
    %v446 = vadd.f32 0.0, %v445
    %v447 = vpop.f32.mrf.mxu0
    %448 = vmatprep.mubr.bf16.mxu0 0
    %449 = vmatmul.mubr.bf16.gmra.mxu0 %v269
    %v450 = vpop.f32.mrf.mxu0
    %v451 = vadd.f32 0.0, %v450
    %v452 = vpop.f32.mrf.mxu0
    %v453 = vpop.f32.mrf.mxu0
    %v454 = vadd.f32 0.0, %v453
    %v455 = vpop.f32.mrf.mxu0
    %456 = vmatprep.mubr.bf16.mxu0 0
    %457 = vmatmul.mubr.bf16.gmra.mxu0 %v270
    %v458 = vpop.f32.mrf.mxu0
    %v459 = vadd.f32 0.0, %v458
    %v460 = vpop.f32.mrf.mxu0
    %v461 = vpop.f32.mrf.mxu0
    %v462 = vadd.f32 0.0, %v461
    %v463 = vpop.f32.mrf.mxu0
    %464 = vmatprep.mubr.bf16.mxu0 0
    %465 = vmatmul.mubr.bf16.gmra.mxu0 %v271
    %v466 = vpop.f32.mrf.mxu0
    %v467 = vadd.f32 0.0, %v466
    %v468 = vpop.f32.mrf.mxu0
    %v469 = vpop.f32.mrf.mxu0
    %v470 = vadd.f32 0.0, %v469
    %v471 = vpop.f32.mrf.mxu0
    %472 = vmatprep.mubr.bf16.mxu0 0
    %473 = vmatmul.mubr.bf16.gmra.mxu0 %v272
    %v474 = vpop.f32.mrf.mxu0
    %v475 = vadd.f32 0.0, %v474
    %v476 = vpop.f32.mrf.mxu0
    %v477 = vpop.f32.mrf.mxu0
    %v478 = vadd.f32 0.0, %v477
    %v479 = vpop.f32.mrf.mxu0
    %480 = vmatprep.mubr.bf16.mxu0 0
    %481 = vmatmul.mubr.bf16.gmra.mxu0 %v273
    %v482 = vpop.f32.mrf.mxu0
    %v483 = vadd.f32 0.0, %v482
    %v484 = vpop.f32.mrf.mxu0
    %v485 = vpop.f32.mrf.mxu0
    %v486 = vadd.f32 0.0, %v485
    %v487 = vpop.f32.mrf.mxu0
    %488 = vmatprep.mubr.bf16.mxu0 0
    %489 = vmatmul.mubr.bf16.gmra.mxu0 %v274
    %v490 = vpop.f32.mrf.mxu0
    %v491 = vadd.f32 0.0, %v490
    %v492 = vpop.f32.mrf.mxu0
    %v493 = vpop.f32.mrf.mxu0
    %v494 = vadd.f32 0.0, %v493
    %v495 = vpop.f32.mrf.mxu0
    %496 = vmatprep.mubr.bf16.mxu0 0
    %497 = vmatmul.mubr.bf16.gmra.mxu0 %v275
    %v498 = vpop.f32.mrf.mxu0
    %v499 = vadd.f32 0.0, %v498
    %v500 = vpop.f32.mrf.mxu0
    %v501 = vpop.f32.mrf.mxu0
    %v502 = vadd.f32 0.0, %v501
    %v503 = vpop.f32.mrf.mxu0
    %504 = vmatprep.mubr.bf16.mxu0 0
    %505 = vmatmul.mubr.bf16.gmra.mxu0 %v276
    %v506 = vpop.f32.mrf.mxu0
    %v507 = vadd.f32 0.0, %v506
    %v508 = vpop.f32.mrf.mxu0
    %v509 = vpop.f32.mrf.mxu0
    %v510 = vadd.f32 0.0, %v509
    %v511 = vpop.f32.mrf.mxu0
    %512 = vmatprep.mubr.bf16.mxu0 0
    %513 = vmatmul.mubr.bf16.gmra.mxu0 %v277
    %v514 = vpop.f32.mrf.mxu0
    %v515 = vadd.f32 0.0, %v514
    %v516 = vpop.f32.mrf.mxu0
    %v517 = vpop.f32.mrf.mxu0
    %v518 = vadd.f32 0.0, %v517
    %v519 = vpop.f32.mrf.mxu0
    %520 = vmatprep.mubr.bf16.mxu0 0
    %521 = vmatmul.mubr.bf16.gmra.mxu0 %v278
    %v522 = vpop.f32.mrf.mxu0
    %v523 = vadd.f32 0.0, %v522
    %v524 = vpop.f32.mrf.mxu0
    %v525 = vpop.f32.mrf.mxu0
    %v526 = vadd.f32 0.0, %v525
    %v527 = vpop.f32.mrf.mxu0
    %528 = vmatprep.mubr.bf16.mxu0 0
    %529 = vmatmul.mubr.bf16.gmra.mxu0 %v279
    %v530 = vpop.f32.mrf.mxu0
    %v531 = vadd.f32 0.0, %v530
    %v532 = vpop.f32.mrf.mxu0
    %v533 = vpop.f32.mrf.mxu0
    %v534 = vadd.f32 0.0, %v533
    %v535 = vpop.f32.mrf.mxu0
    %536 = vmatprep.mubr.bf16.mxu0 0
    %537 = vmatmul.mubr.bf16.gmra.mxu0 %v280
    %v538 = vpop.f32.mrf.mxu0
    %v539 = vadd.f32 0.0, %v538
    %v540 = vpop.f32.mrf.mxu0
    %v541 = vpop.f32.mrf.mxu0
    %v542 = vadd.f32 0.0, %v541
    %v543 = vpop.f32.mrf.mxu0
    %544 = vmatprep.mubr.bf16.mxu0 0
    %545 = vmatmul.mubr.bf16.gmra.mxu0 %v281
    %v546 = vpop.f32.mrf.mxu0
    %v547 = vadd.f32 0.0, %v546
    %v548 = vpop.f32.mrf.mxu0
    %v549 = vpop.f32.mrf.mxu0
    %v550 = vadd.f32 0.0, %v549
    %v551 = vpop.f32.mrf.mxu0
    %552 = vmatprep.mubr.bf16.mxu0 0
    %553 = vmatmul.mubr.bf16.gmra.mxu0 %v282
    %v554 = vpop.f32.mrf.mxu0
    %v555 = vadd.f32 0.0, %v554
    %v556 = vpop.f32.mrf.mxu0
    %v557 = vpop.f32.mrf.mxu0
    %v558 = vadd.f32 0.0, %v557
    %v559 = vpop.f32.mrf.mxu0
    %560 = vmatprep.mubr.bf16.mxu0 0
    %561 = vmatmul.mubr.bf16.gmra.mxu0 %v283
    %v562 = vpop.f32.mrf.mxu0
    %v563 = vadd.f32 0.0, %v562
    %v564 = vpop.f32.mrf.mxu0
    %v565 = vpop.f32.mrf.mxu0
    %v566 = vadd.f32 0.0, %v565
    %v567 = vpop.f32.mrf.mxu0
    %568 = vmatprep.mubr.bf16.mxu0 0
    %569 = vmatmul.mubr.bf16.gmra.mxu0 %v284
    %v570 = vpop.f32.mrf.mxu0
    %v571 = vadd.f32 0.0, %v570
    %v572 = vpop.f32.mrf.mxu0
    %v573 = vpop.f32.mrf.mxu0
    %v574 = vadd.f32 0.0, %v573
    %v575 = vpop.f32.mrf.mxu0
    %576 = vmatprep.mubr.bf16.mxu0 0
    %577 = vmatmul.mubr.bf16.gmra.mxu0 %v285
    %v578 = vpop.f32.mrf.mxu0
    %v579 = vadd.f32 0.0, %v578
    %v580 = vpop.f32.mrf.mxu0
    %v581 = vpop.f32.mrf.mxu0
    %v582 = vadd.f32 0.0, %v581
    %v583 = vpop.f32.mrf.mxu0
    %584 = vmatprep.mubr.bf16.mxu0 0
    %585 = vmatmul.mubr.bf16.gmra.mxu0 %v286
    %v586 = vpop.f32.mrf.mxu0
    %v587 = vadd.f32 0.0, %v586
    %v588 = vpop.f32.mrf.mxu0
    %v589 = vpop.f32.mrf.mxu0
    %v590 = vadd.f32 0.0, %v589
    %v591 = vpop.f32.mrf.mxu0
    %592 = vmatprep.mubr.bf16.mxu0 0
    %593 = vmatmul.mubr.bf16.gmra.mxu0 %v287
    %v594 = vpop.f32.mrf.mxu0
    %v595 = vadd.f32 0.0, %v594
    %v596 = vpop.f32.mrf.mxu0
    %v597 = vpop.f32.mrf.mxu0
    %v598 = vadd.f32 0.0, %v597
    %v599 = vpop.f32.mrf.mxu0
    %600 = vmatprep.mubr.bf16.mxu0 0
    %601 = vmatmul.mubr.bf16.gmra.mxu0 %v288
    %v602 = vpop.f32.mrf.mxu0
    %v603 = vadd.f32 0.0, %v602
    %v604 = vpop.f32.mrf.mxu0
    %v605 = vpop.f32.mrf.mxu0
    %v606 = vadd.f32 0.0, %v605
    %v607 = vpop.f32.mrf.mxu0
    %608 = vmatprep.mubr.bf16.mxu0 0
    %609 = vmatmul.mubr.bf16.gmra.mxu0 %v289
    %v610 = vpop.f32.mrf.mxu0
    %v611 = vadd.f32 0.0, %v610
    %v612 = vpop.f32.mrf.mxu0
    %v613 = vpop.f32.mrf.mxu0
    %v614 = vadd.f32 0.0, %v613
    %v615 = vpop.f32.mrf.mxu0
    %616 = vmatprep.mubr.bf16.mxu0 0
    %617 = vmatmul.mubr.bf16.gmra.mxu0 %v290
    %v618 = vpop.f32.mrf.mxu0
    %v619 = vadd.f32 0.0, %v618
    %v620 = vpop.f32.mrf.mxu0
    %v621 = vpop.f32.mrf.mxu0
    %v622 = vadd.f32 0.0, %v621
    %v623 = vpop.f32.mrf.mxu0
    %624 = vmatprep.mubr.bf16.mxu0 0
    %625 = vmatmul.mubr.bf16.gmra.mxu0 %v291
    %v626 = vpop.f32.mrf.mxu0
    %v627 = vadd.f32 0.0, %v626
    %v628 = vpop.f32.mrf.mxu0
    %v629 = vpop.f32.mrf.mxu0
    %v630 = vadd.f32 0.0, %v629
    %v631 = vpop.f32.mrf.mxu0
    %632 = vmatprep.mubr.bf16.mxu0 0
    %633 = vmatmul.mubr.bf16.gmra.mxu0 %v292
    %v634 = vpop.f32.mrf.mxu0
    %v635 = vadd.f32 0.0, %v634
    %v636 = vpop.f32.mrf.mxu0
    %v637 = vpop.f32.mrf.mxu0
    %v638 = vadd.f32 0.0, %v637
    %v639 = vpop.f32.mrf.mxu0
    %640 = vmatprep.mubr.bf16.mxu0 0
    %641 = vmatmul.mubr.bf16.gmra.mxu0 %v293
    %v642 = vpop.f32.mrf.mxu0
    %v643 = vadd.f32 0.0, %v642
    %v644 = vpop.f32.mrf.mxu0
    %v645 = vpop.f32.mrf.mxu0
    %v646 = vadd.f32 0.0, %v645
    %v647 = vpop.f32.mrf.mxu0
    %648 = vmatprep.mubr.bf16.mxu0 0
    %649 = vmatmul.mubr.bf16.gmra.mxu0 %v294
    %v650 = vpop.f32.mrf.mxu0
    %v651 = vadd.f32 0.0, %v650
    %v652 = vpop.f32.mrf.mxu0
    %v653 = vpop.f32.mrf.mxu0
    %v654 = vadd.f32 0.0, %v653
    %v655 = vpop.f32.mrf.mxu0
    %656 = vmatprep.mubr.bf16.mxu0 0
    %657 = vmatmul.mubr.bf16.gmra.mxu0 %v295
    %v658 = vpop.f32.mrf.mxu0
    %v659 = vadd.f32 0.0, %v658
    %v660 = vpop.f32.mrf.mxu0
    %v661 = vpop.f32.mrf.mxu0
    %v662 = vadd.f32 0.0, %v661
    %v663 = vpop.f32.mrf.mxu0
    %664 = vdwg.mxu0
    %v665 = vpack.c.bf16 %v414, %v411
    %v666 = vpack.c.bf16 %v422, %v419
    %v667 = vpack.c.bf16 %v430, %v427
    %v668 = vpack.c.bf16 %v438, %v435
    %v669 = vpack.c.bf16 %v446, %v443
    %v670 = vpack.c.bf16 %v454, %v451
    %v671 = vpack.c.bf16 %v462, %v459
    %v672 = vpack.c.bf16 %v470, %v467
    %v673 = vpack.c.bf16 %v478, %v475
    %v674 = vpack.c.bf16 %v486, %v483
    %v675 = vpack.c.bf16 %v494, %v491
    %v676 = vpack.c.bf16 %v502, %v499
    %v677 = vpack.c.bf16 %v510, %v507
    %v678 = vpack.c.bf16 %v518, %v515
    %v679 = vpack.c.bf16 %v526, %v523
    %v680 = vpack.c.bf16 %v534, %v531
    %v681 = vpack.c.bf16 %v542, %v539
    %v682 = vpack.c.bf16 %v550, %v547
    %v683 = vpack.c.bf16 %v558, %v555
    %v684 = vpack.c.bf16 %v566, %v563
    %v685 = vpack.c.bf16 %v574, %v571
    %v686 = vpack.c.bf16 %v582, %v579
    %v687 = vpack.c.bf16 %v590, %v587
    %v688 = vpack.c.bf16 %v598, %v595
    %v689 = vpack.c.bf16 %v606, %v603
    %v690 = vpack.c.bf16 %v614, %v611
    %v691 = vpack.c.bf16 %v622, %v619
    %v692 = vpack.c.bf16 %v630, %v627
    %v693 = vpack.c.bf16 %v638, %v635
    %v694 = vpack.c.bf16 %v646, %v643
    %v695 = vpack.c.bf16 %v654, %v651
    %v696 = vpack.c.bf16 %v662, %v659
    %v729 = vunpack.c.l.b16 %v665
    %v730 = vunpack.c.h.b16 %v665
    %v731 = vunpack.c.l.b16 %v666
    %v732 = vunpack.c.h.b16 %v666
    %v733 = vunpack.c.l.b16 %v667
    %v734 = vunpack.c.h.b16 %v667
    %v735 = vunpack.c.l.b16 %v668
    %v736 = vunpack.c.h.b16 %v668
    %v737 = vunpack.c.l.b16 %v669
    %v738 = vunpack.c.h.b16 %v669
    %v739 = vunpack.c.l.b16 %v670
    %v740 = vunpack.c.h.b16 %v670
    %v741 = vunpack.c.l.b16 %v671
    %v742 = vunpack.c.h.b16 %v671
    %v743 = vunpack.c.l.b16 %v672
    %v744 = vunpack.c.h.b16 %v672
    %v745 = vunpack.c.l.b16 %v673
    %v746 = vunpack.c.h.b16 %v673
    %v747 = vunpack.c.l.b16 %v674
    %v748 = vunpack.c.h.b16 %v674
    %v749 = vunpack.c.l.b16 %v675
    %v750 = vunpack.c.h.b16 %v675
    %v751 = vunpack.c.l.b16 %v676
    %v752 = vunpack.c.h.b16 %v676
    %v753 = vunpack.c.l.b16 %v677
    %v754 = vunpack.c.h.b16 %v677
    %v755 = vunpack.c.l.b16 %v678
    %v756 = vunpack.c.h.b16 %v678
    %v757 = vunpack.c.l.b16 %v679
    %v758 = vunpack.c.h.b16 %v679
    %v759 = vunpack.c.l.b16 %v680
    %v760 = vunpack.c.h.b16 %v680
    %v761 = vunpack.c.l.b16 %v681
    %v762 = vunpack.c.h.b16 %v681
    %v763 = vunpack.c.l.b16 %v682
    %v764 = vunpack.c.h.b16 %v682
    %v765 = vunpack.c.l.b16 %v683
    %v766 = vunpack.c.h.b16 %v683
    %v767 = vunpack.c.l.b16 %v684
    %v768 = vunpack.c.h.b16 %v684
    %v769 = vunpack.c.l.b16 %v685
    %v770 = vunpack.c.h.b16 %v685
    %v771 = vunpack.c.l.b16 %v686
    %v772 = vunpack.c.h.b16 %v686
    %v773 = vunpack.c.l.b16 %v687
    %v774 = vunpack.c.h.b16 %v687
    %v775 = vunpack.c.l.b16 %v688
    %v776 = vunpack.c.h.b16 %v688
    %v777 = vunpack.c.l.b16 %v689
    %v778 = vunpack.c.h.b16 %v689
    %v779 = vunpack.c.l.b16 %v690
    %v780 = vunpack.c.h.b16 %v690
    %v781 = vunpack.c.l.b16 %v691
    %v782 = vunpack.c.h.b16 %v691
    %v783 = vunpack.c.l.b16 %v692
    %v784 = vunpack.c.h.b16 %v692
    %v785 = vunpack.c.l.b16 %v693
    %v786 = vunpack.c.h.b16 %v693
    %v787 = vunpack.c.l.b16 %v694
    %v788 = vunpack.c.h.b16 %v694
    %v789 = vunpack.c.l.b16 %v695
    %v790 = vunpack.c.h.b16 %v695
    %v791 = vunpack.c.l.b16 %v696
    %v792 = vunpack.c.h.b16 %v696
    %v793 = vpack.c.b16 %v729, %v729
    %v794 = vpack.c.b16 %v730, %v730
    %v795 = vpack.c.b16 %v731, %v731
    %v796 = vpack.c.b16 %v732, %v732
    %v797 = vpack.c.b16 %v733, %v733
    %v798 = vpack.c.b16 %v734, %v734
    %v799 = vpack.c.b16 %v735, %v735
    %v800 = vpack.c.b16 %v736, %v736
    %v801 = vpack.c.b16 %v737, %v737
    %v802 = vpack.c.b16 %v738, %v738
    %v803 = vpack.c.b16 %v739, %v739
    %v804 = vpack.c.b16 %v740, %v740
    %v805 = vpack.c.b16 %v741, %v741
    %v806 = vpack.c.b16 %v742, %v742
    %v807 = vpack.c.b16 %v743, %v743
    %v808 = vpack.c.b16 %v744, %v744
    %v809 = vpack.c.b16 %v745, %v745
    %v810 = vpack.c.b16 %v746, %v746
    %v811 = vpack.c.b16 %v747, %v747
    %v812 = vpack.c.b16 %v748, %v748
    %v813 = vpack.c.b16 %v749, %v749
    %v814 = vpack.c.b16 %v750, %v750
    %v815 = vpack.c.b16 %v751, %v751
    %v816 = vpack.c.b16 %v752, %v752
    %v817 = vpack.c.b16 %v753, %v753
    %v818 = vpack.c.b16 %v754, %v754
    %v819 = vpack.c.b16 %v755, %v755
    %v820 = vpack.c.b16 %v756, %v756
    %v821 = vpack.c.b16 %v757, %v757
    %v822 = vpack.c.b16 %v758, %v758
    %v823 = vpack.c.b16 %v759, %v759
    %v824 = vpack.c.b16 %v760, %v760
    %v825 = vpack.c.b16 %v761, %v761
    %v826 = vpack.c.b16 %v762, %v762
    %v827 = vpack.c.b16 %v763, %v763
    %v828 = vpack.c.b16 %v764, %v764
    %v829 = vpack.c.b16 %v765, %v765
    %v830 = vpack.c.b16 %v766, %v766
    %v831 = vpack.c.b16 %v767, %v767
    %v832 = vpack.c.b16 %v768, %v768
    %v833 = vpack.c.b16 %v769, %v769
    %v834 = vpack.c.b16 %v770, %v770
    %v835 = vpack.c.b16 %v771, %v771
    %v836 = vpack.c.b16 %v772, %v772
    %v837 = vpack.c.b16 %v773, %v773
    %v838 = vpack.c.b16 %v774, %v774
    %v839 = vpack.c.b16 %v775, %v775
    %v840 = vpack.c.b16 %v776, %v776
    %v841 = vpack.c.b16 %v777, %v777
    %v842 = vpack.c.b16 %v778, %v778
    %v843 = vpack.c.b16 %v779, %v779
    %v844 = vpack.c.b16 %v780, %v780
    %v845 = vpack.c.b16 %v781, %v781
    %v846 = vpack.c.b16 %v782, %v782
    %v847 = vpack.c.b16 %v783, %v783
    %v848 = vpack.c.b16 %v784, %v784
    %v849 = vpack.c.b16 %v785, %v785
    %v850 = vpack.c.b16 %v786, %v786
    %v851 = vpack.c.b16 %v787, %v787
    %v852 = vpack.c.b16 %v788, %v788
    %v853 = vpack.c.b16 %v789, %v789
    %v854 = vpack.c.b16 %v790, %v790
    %v855 = vpack.c.b16 %v791, %v791
    %v856 = vpack.c.b16 %v792, %v792
    %921 = vst [vmem:[#allocation9] sm:$0xf] %v793
    %922 = vst [vmem:[#allocation9 + $0x4] sm:$0xf] %v794
    %923 = vst [vmem:[#allocation9 + $0x8] sm:$0xf] %v795
    %924 = vst [vmem:[#allocation9 + $0xc] sm:$0xf] %v796
    %925 = vst [vmem:[#allocation9 + $0x10] sm:$0xf] %v797
    %926 = vst [vmem:[#allocation9 + $0x14] sm:$0xf] %v798
    %927 = vst [vmem:[#allocation9 + $0x18] sm:$0xf] %v799
    %928 = vst [vmem:[#allocation9 + $0x1c] sm:$0xf] %v800
    %929 = vst [vmem:[#allocation9 + $0x20] sm:$0xf] %v801
    %930 = vst [vmem:[#allocation9 + $0x24] sm:$0xf] %v802
    %931 = vst [vmem:[#allocation9 + $0x28] sm:$0xf] %v803
    %932 = vst [vmem:[#allocation9 + $0x2c] sm:$0xf] %v804
    %933 = vst [vmem:[#allocation9 + $0x30] sm:$0xf] %v805
    %934 = vst [vmem:[#allocation9 + $0x34] sm:$0xf] %v806
    %935 = vst [vmem:[#allocation9 + $0x38] sm:$0xf] %v807
    %936 = vst [vmem:[#allocation9 + $0x3c] sm:$0xf] %v808
    %937 = vst [vmem:[#allocation9 + $0x40] sm:$0xf] %v809
    %938 = vst [vmem:[#allocation9 + $0x44] sm:$0xf] %v810
    %939 = vst [vmem:[#allocation9 + $0x48] sm:$0xf] %v811
    %940 = vst [vmem:[#allocation9 + $0x4c] sm:$0xf] %v812
    %941 = vst [vmem:[#allocation9 + $0x50] sm:$0xf] %v813
    %942 = vst [vmem:[#allocation9 + $0x54] sm:$0xf] %v814
    %943 = vst [vmem:[#allocation9 + $0x58] sm:$0xf] %v815
    %944 = vst [vmem:[#allocation9 + $0x5c] sm:$0xf] %v816
    %945 = vst [vmem:[#allocation9 + $0x60] sm:$0xf] %v817
    %946 = vst [vmem:[#allocation9 + $0x64] sm:$0xf] %v818
    %947 = vst [vmem:[#allocation9 + $0x68] sm:$0xf] %v819
    %948 = vst [vmem:[#allocation9 + $0x6c] sm:$0xf] %v820
    %949 = vst [vmem:[#allocation9 + $0x70] sm:$0xf] %v821
    %950 = vst [vmem:[#allocation9 + $0x74] sm:$0xf] %v822
    %951 = vst [vmem:[#allocation9 + $0x78] sm:$0xf] %v823
    %952 = vst [vmem:[#allocation9 + $0x7c] sm:$0xf] %v824
    %953 = vst [vmem:[#allocation9 + $0x80] sm:$0xf] %v825
    %954 = vst [vmem:[#allocation9 + $0x84] sm:$0xf] %v826
    %955 = vst [vmem:[#allocation9 + $0x88] sm:$0xf] %v827
    %956 = vst [vmem:[#allocation9 + $0x8c] sm:$0xf] %v828
    %957 = vst [vmem:[#allocation9 + $0x90] sm:$0xf] %v829
    %958 = vst [vmem:[#allocation9 + $0x94] sm:$0xf] %v830
    %959 = vst [vmem:[#allocation9 + $0x98] sm:$0xf] %v831
    %960 = vst [vmem:[#allocation9 + $0x9c] sm:$0xf] %v832
    %961 = vst [vmem:[#allocation9 + $0xa0] sm:$0xf] %v833
    %962 = vst [vmem:[#allocation9 + $0xa4] sm:$0xf] %v834
    %963 = vst [vmem:[#allocation9 + $0xa8] sm:$0xf] %v835
    %964 = vst [vmem:[#allocation9 + $0xac] sm:$0xf] %v836
    %965 = vst [vmem:[#allocation9 + $0xb0] sm:$0xf] %v837
    %966 = vst [vmem:[#allocation9 + $0xb4] sm:$0xf] %v838
    %967 = vst [vmem:[#allocation9 + $0xb8] sm:$0xf] %v839
    %968 = vst [vmem:[#allocation9 + $0xbc] sm:$0xf] %v840
    %969 = vst [vmem:[#allocation9 + $0xc0] sm:$0xf] %v841
    %970 = vst [vmem:[#allocation9 + $0xc4] sm:$0xf] %v842
    %971 = vst [vmem:[#allocation9 + $0xc8] sm:$0xf] %v843
    %972 = vst [vmem:[#allocation9 + $0xcc] sm:$0xf] %v844
    %973 = vst [vmem:[#allocation9 + $0xd0] sm:$0xf] %v845
    %974 = vst [vmem:[#allocation9 + $0xd4] sm:$0xf] %v846
    %975 = vst [vmem:[#allocation9 + $0xd8] sm:$0xf] %v847
    %976 = vst [vmem:[#allocation9 + $0xdc] sm:$0xf] %v848
    %977 = vst [vmem:[#allocation9 + $0xe0] sm:$0xf] %v849
    %978 = vst [vmem:[#allocation9 + $0xe4] sm:$0xf] %v850
    %979 = vst [vmem:[#allocation9 + $0xe8] sm:$0xf] %v851
    %980 = vst [vmem:[#allocation9 + $0xec] sm:$0xf] %v852
    %981 = vst [vmem:[#allocation9 + $0xf0] sm:$0xf] %v853
    %982 = vst [vmem:[#allocation9 + $0xf4] sm:$0xf] %v854
    %983 = vst [vmem:[#allocation9 + $0xf8] sm:$0xf] %v855
    %984 = vst [vmem:[#allocation9 + $0xfc] sm:$0xf] %v856
    %v985 = vld [vmem:[#allocation2] sm:$0xff]
    %v986 = vadd.f32 %v411, %v414
    %v987 = vadd.f32 %v986, %v419
    %v988 = vadd.f32 %v987, %v422
    %v989 = vadd.f32 %v988, %v427
    %v990 = vadd.f32 %v989, %v430
    %v991 = vadd.f32 %v990, %v435
    %v992 = vadd.f32 %v991, %v438
    %v993 = vadd.f32 %v992, %v443
    %v994 = vadd.f32 %v993, %v446
    %v995 = vadd.f32 %v994, %v451
    %v996 = vadd.f32 %v995, %v454
    %v997 = vadd.f32 %v996, %v459
    %v998 = vadd.f32 %v997, %v462
    %v999 = vadd.f32 %v998, %v467
    %v1000 = vadd.f32 %v999, %v470
    %v1001 = vadd.f32 %v1000, %v475
    %v1002 = vadd.f32 %v1001, %v478
    %v1003 = vadd.f32 %v1002, %v483
    %v1004 = vadd.f32 %v1003, %v486
    %v1005 = vadd.f32 %v1004, %v491
    %v1006 = vadd.f32 %v1005, %v494
    %v1007 = vadd.f32 %v1006, %v499
    %v1008 = vadd.f32 %v1007, %v502
    %v1009 = vadd.f32 %v1008, %v507
    %v1010 = vadd.f32 %v1009, %v510
    %v1011 = vadd.f32 %v1010, %v515
    %v1012 = vadd.f32 %v1011, %v518
    %v1013 = vadd.f32 %v1012, %v523
    %v1014 = vadd.f32 %v1013, %v526
    %v1015 = vadd.f32 %v1014, %v531
    %v1016 = vadd.f32 %v1015, %v534
    %v1017 = vadd.f32 %v1016, %v539
    %v1018 = vadd.f32 %v1017, %v542
    %v1019 = vadd.f32 %v1018, %v547
    %v1020 = vadd.f32 %v1019, %v550
    %v1021 = vadd.f32 %v1020, %v555
    %v1022 = vadd.f32 %v1021, %v558
    %v1023 = vadd.f32 %v1022, %v563
    %v1024 = vadd.f32 %v1023, %v566
    %v1025 = vadd.f32 %v1024, %v571
    %v1026 = vadd.f32 %v1025, %v574
    %v1027 = vadd.f32 %v1026, %v579
    %v1028 = vadd.f32 %v1027, %v582
    %v1029 = vadd.f32 %v1028, %v587
    %v1030 = vadd.f32 %v1029, %v590
    %v1031 = vadd.f32 %v1030, %v595
    %v1032 = vadd.f32 %v1031, %v598
    %v1033 = vadd.f32 %v1032, %v603
    %v1034 = vadd.f32 %v1033, %v606
    %v1035 = vadd.f32 %v1034, %v611
    %v1036 = vadd.f32 %v1035, %v614
    %v1037 = vadd.f32 %v1036, %v619
    %v1038 = vadd.f32 %v1037, %v622
    %v1039 = vadd.f32 %v1038, %v627
    %v1040 = vadd.f32 %v1039, %v630
    %v1041 = vadd.f32 %v1040, %v635
    %v1042 = vadd.f32 %v1041, %v638
    %v1043 = vadd.f32 %v1042, %v643
    %v1044 = vadd.f32 %v1043, %v646
    %v1045 = vadd.f32 %v1044, %v651
    %v1046 = vadd.f32 %v1045, %v654
    %v1047 = vadd.f32 %v1046, %v659
    %v1048 = vadd.f32 %v1047, %v662
    %v1049 = vadd.f32 %v985, %v1048
    %1050 = vst [vmem:[#allocation2] sm:$0xff] %v1049
    %v1051 = vld [vmem:[#allocation3] sm:$0xff]
    %v1052 = vmul.f32 %v411, %v411
    %v1053 = vmul.f32 %v414, %v414
    %v1054 = vmul.f32 %v419, %v419
    %v1055 = vmul.f32 %v422, %v422
    %v1056 = vmul.f32 %v427, %v427
    %v1057 = vmul.f32 %v430, %v430
    %v1058 = vmul.f32 %v435, %v435
    %v1059 = vmul.f32 %v438, %v438
    %v1060 = vmul.f32 %v443, %v443
    %v1061 = vmul.f32 %v446, %v446
    %v1062 = vmul.f32 %v451, %v451
    %v1063 = vmul.f32 %v454, %v454
    %v1064 = vmul.f32 %v459, %v459
    %v1065 = vmul.f32 %v462, %v462
    %v1066 = vmul.f32 %v467, %v467
    %v1067 = vmul.f32 %v470, %v470
    %v1068 = vmul.f32 %v475, %v475
    %v1069 = vmul.f32 %v478, %v478
    %v1070 = vmul.f32 %v483, %v483
    %v1071 = vmul.f32 %v486, %v486
    %v1072 = vmul.f32 %v491, %v491
    %v1073 = vmul.f32 %v494, %v494
    %v1074 = vmul.f32 %v499, %v499
    %v1075 = vmul.f32 %v502, %v502
    %v1076 = vmul.f32 %v507, %v507
    %v1077 = vmul.f32 %v510, %v510
    %v1078 = vmul.f32 %v515, %v515
    %v1079 = vmul.f32 %v518, %v518
    %v1080 = vmul.f32 %v523, %v523
    %v1081 = vmul.f32 %v526, %v526
    %v1082 = vmul.f32 %v531, %v531
    %v1083 = vmul.f32 %v534, %v534
    %v1084 = vmul.f32 %v539, %v539
    %v1085 = vmul.f32 %v542, %v542
    %v1086 = vmul.f32 %v547, %v547
    %v1087 = vmul.f32 %v550, %v550
    %v1088 = vmul.f32 %v555, %v555
    %v1089 = vmul.f32 %v558, %v558
    %v1090 = vmul.f32 %v563, %v563
    %v1091 = vmul.f32 %v566, %v566
    %v1092 = vmul.f32 %v571, %v571
    %v1093 = vmul.f32 %v574, %v574
    %v1094 = vmul.f32 %v579, %v579
    %v1095 = vmul.f32 %v582, %v582
    %v1096 = vmul.f32 %v587, %v587
    %v1097 = vmul.f32 %v590, %v590
    %v1098 = vmul.f32 %v595, %v595
    %v1099 = vmul.f32 %v598, %v598
    %v1100 = vmul.f32 %v603, %v603
    %v1101 = vmul.f32 %v606, %v606
    %v1102 = vmul.f32 %v611, %v611
    %v1103 = vmul.f32 %v614, %v614
    %v1104 = vmul.f32 %v619, %v619
    %v1105 = vmul.f32 %v622, %v622
    %v1106 = vmul.f32 %v627, %v627
    %v1107 = vmul.f32 %v630, %v630
    %v1108 = vmul.f32 %v635, %v635
    %v1109 = vmul.f32 %v638, %v638
    %v1110 = vmul.f32 %v643, %v643
    %v1111 = vmul.f32 %v646, %v646
    %v1112 = vmul.f32 %v651, %v651
    %v1113 = vmul.f32 %v654, %v654
    %v1114 = vmul.f32 %v659, %v659
    %v1115 = vmul.f32 %v662, %v662
    %v1116 = vadd.f32 %v1052, %v1053
    %v1117 = vadd.f32 %v1116, %v1054
    %v1118 = vadd.f32 %v1117, %v1055
    %v1119 = vadd.f32 %v1118, %v1056
    %v1120 = vadd.f32 %v1119, %v1057
    %v1121 = vadd.f32 %v1120, %v1058
    %v1122 = vadd.f32 %v1121, %v1059
    %v1123 = vadd.f32 %v1122, %v1060
    %v1124 = vadd.f32 %v1123, %v1061
    %v1125 = vadd.f32 %v1124, %v1062
    %v1126 = vadd.f32 %v1125, %v1063
    %v1127 = vadd.f32 %v1126, %v1064
    %v1128 = vadd.f32 %v1127, %v1065
    %v1129 = vadd.f32 %v1128, %v1066
    %v1130 = vadd.f32 %v1129, %v1067
    %v1131 = vadd.f32 %v1130, %v1068
    %v1132 = vadd.f32 %v1131, %v1069
    %v1133 = vadd.f32 %v1132, %v1070
    %v1134 = vadd.f32 %v1133, %v1071
    %v1135 = vadd.f32 %v1134, %v1072
    %v1136 = vadd.f32 %v1135, %v1073
    %v1137 = vadd.f32 %v1136, %v1074
    %v1138 = vadd.f32 %v1137, %v1075
    %v1139 = vadd.f32 %v1138, %v1076
    %v1140 = vadd.f32 %v1139, %v1077
    %v1141 = vadd.f32 %v1140, %v1078
    %v1142 = vadd.f32 %v1141, %v1079
    %v1143 = vadd.f32 %v1142, %v1080
    %v1144 = vadd.f32 %v1143, %v1081
    %v1145 = vadd.f32 %v1144, %v1082
    %v1146 = vadd.f32 %v1145, %v1083
    %v1147 = vadd.f32 %v1146, %v1084
    %v1148 = vadd.f32 %v1147, %v1085
    %v1149 = vadd.f32 %v1148, %v1086
    %v1150 = vadd.f32 %v1149, %v1087
    %v1151 = vadd.f32 %v1150, %v1088
    %v1152 = vadd.f32 %v1151, %v1089
    %v1153 = vadd.f32 %v1152, %v1090
    %v1154 = vadd.f32 %v1153, %v1091
    %v1155 = vadd.f32 %v1154, %v1092
    %v1156 = vadd.f32 %v1155, %v1093
    %v1157 = vadd.f32 %v1156, %v1094
    %v1158 = vadd.f32 %v1157, %v1095
    %v1159 = vadd.f32 %v1158, %v1096
    %v1160 = vadd.f32 %v1159, %v1097
    %v1161 = vadd.f32 %v1160, %v1098
    %v1162 = vadd.f32 %v1161, %v1099
    %v1163 = vadd.f32 %v1162, %v1100
    %v1164 = vadd.f32 %v1163, %v1101
    %v1165 = vadd.f32 %v1164, %v1102
    %v1166 = vadd.f32 %v1165, %v1103
    %v1167 = vadd.f32 %v1166, %v1104
    %v1168 = vadd.f32 %v1167, %v1105
    %v1169 = vadd.f32 %v1168, %v1106
    %v1170 = vadd.f32 %v1169, %v1107
    %v1171 = vadd.f32 %v1170, %v1108
    %v1172 = vadd.f32 %v1171, %v1109
    %v1173 = vadd.f32 %v1172, %v1110
    %v1174 = vadd.f32 %v1173, %v1111
    %v1175 = vadd.f32 %v1174, %v1112
    %v1176 = vadd.f32 %v1175, %v1113
    %v1177 = vadd.f32 %v1176, %v1114
    %v1178 = vadd.f32 %v1177, %v1115
    %v1179 = vadd.f32 %v1051, %v1178
    %1180 = vst [vmem:[#allocation3] sm:$0xff] %v1179
    // Predicated region
    $region30: #{tpu_custom_call.1} parent=1 // pred_check
      %p1181 = pneg %p50
    $region31: #{tpu_custom_call.1} parent=1 // pred_check_branch
      %1183 = sbr.rel (%p1181) target = $region33
    $region32: #{tpu_custom_call.1} parent=1 // pred_region
      %v1184 = vld [vmem:[#allocation2] sm:$0xff]
      %v1185 = vrot.slane %v1184, 4
      %v1186 = vadd.f32 %v1184, %v1185
      %v1187 = vrot.slane %v1186, 2
      %v1188 = vadd.f32 %v1186, %v1187
      %v1189 = vrot.slane %v1188, 1
      %v1190 = vadd.f32 %v1188, %v1189
      %v1191 = vld [vmem:[#allocation3] sm:$0xff]
      %v1192 = vrot.slane %v1191, 4
      %v1193 = vadd.f32 %v1191, %v1192
      %v1194 = vrot.slane %v1193, 2
      %v1195 = vadd.f32 %v1193, %v1194
      %v1196 = vrot.slane %v1195, 1
      %v1197 = vadd.f32 %v1195, %v1196
      %v1198 = vmul.f32 %v1190, 0.001953125
      %v1199 = vmul.f32 %v1197, 0.001953125
      %v1200 = vmul.f32 %v1198, %v1198
      %v1201 = vsub.f32 %v1199, %v1200
      %v1202 = vmax.f32 %v1201, 0.0
      %v1203 = vld [vmem:[%s2] sm:$0x1]
      %v1204 = vadd.f32 %v1202, 1e-05
      %v1205 = vrsqrt.pop %v1204
      %v1206 = vmul.f32 %v1203, %v1205
      %v1207 = vld [vmem:[%s3] sm:$0x1]
      %v1208 = vmul.f32 %v1198, %v1206
      %v1209 = vsub.f32 %v1207, %v1208
      %1210 = vst [vmem:[#allocation10] sm:$0x1] %v1206
      %1211 = vst [vmem:[#allocation10 + $0x1] sm:$0x1] %v1209
    $region33: #{tpu_custom_call.1} parent=1 // pred_fallthru
      _
    // Predicated region
    $region34: #{tpu_custom_call.1} parent=1 // pred_check
      _
    $region35: #{tpu_custom_call.1} parent=1 // pred_check_branch
      %1213 = sbr.rel (0) target = $region37
    $region36: #{tpu_custom_call.1} parent=1 // pred_region
      %s1215 = ssub.s32 4096, 4096
      %1216 = vsyncadd [#allocation6], %s1215
      %s1217 = sshll.u32 [#allocation9], 4
      %s1218 = int_to_ptr.vmem [resolvable:$true] %s1217
      %1223 = dma.vmem_to_hbm [thread:$0]  %s1218, 4096, %s4, [#allocation6], 64, 64, 4
    $region37: #{tpu_custom_call.1} parent=1 // pred_fallthru
      _
    // Predicated region
    $region38: #{tpu_custom_call.1} parent=1 // pred_check
      _
    $region39: #{tpu_custom_call.1} parent=1 // pred_check_branch
      %1225 = sbr.rel (0) target = $region41
    $region40: #{tpu_custom_call.1} parent=1 // pred_region
      %s1227 = ssub.s32 32, 32
      %1228 = vsyncadd [#allocation11], %s1227
      %s1230 = sshll.u32 [#allocation10], 4
      %s1231 = int_to_ptr.vmem [resolvable:$true] %s1230
      %1233 = dma.vmem_to_hbm [thread:$0]  %s1231, 32, %s5, [#allocation11]
    $region41: #{tpu_custom_call.1} parent=1 // pred_fallthru
      _
    // Predicated region
    $region42: #{tpu_custom_call.1} parent=1 // pred_check
      _
    $region43: #{tpu_custom_call.1} parent=1 // pred_check_branch
      %1235 = sbr.rel (0) target = $region45
    $region44: #{tpu_custom_call.1} parent=1 // pred_region
      %1236 = dma.done [#allocation6], 4096
    $region45: #{tpu_custom_call.1} parent=1 // pred_fallthru
      _
    // Predicated region
    $region46: #{tpu_custom_call.1} parent=1 // pred_check
      _
    $region47: #{tpu_custom_call.1} parent=1 // pred_check_branch
      %1238 = sbr.rel (0) target = $region49
    $region48: #{tpu_custom_call.1} parent=1 // pred_region
      %1239 = dma.done [#allocation11], 32
    $region49: #{tpu_custom_call.1} parent=1 // pred_fallthru
      _
    %1240 = vsyncpa [#allocation5], 1
    %1241 = vsyncpa [#allocation8], 1
    %1242 = vsyncpa [#allocation6], 1
    %1243 = vsyncpa [#allocation11], 1

</llo_original>
